<compile_context>
chip_gen: v7x
topology: tpu7x:2x2x1
jax: 0.10.0
libtpu: 0.0.40
codegen_flags: <defaults>
</compile_context>

<pallas_src>
import jax
import jax.numpy as jnp
from jax import lax
from jax.experimental import pallas as pl
from jax.experimental.pallas import tpu as pltpu


def _round_up(x, m):
    return ((x + m - 1) // m) * m


def _pillar_vfe_kernel(feat_ref, aux_ref, w_ref, out_ref):
    """One tile of TN pillars.

    feat_ref: (TN, P, 4)  raw point features (x, y, z, intensity); padded slots are 0
    aux_ref : (TN, 4)     per-pillar [center_x, center_y, center_z, num_points]
    w_ref   : (11, C)     rows 0:4 = W_point, 4:7 = W_cluster, 7:10 = W_center,
                          row 10 = bias   (BatchNorm already folded into all of them)
    out_ref : (TN, C)
    """
    tn, p, cr = feat_ref.shape
    c = out_ref.shape[-1]

    feat = feat_ref[...].astype(jnp.float32)              # (TN, P, 4)
    aux = aux_ref[...].astype(jnp.float32)                # (TN, 4)
    center = aux[:, 0:3]                                   # (TN, 3)
    npts = aux[:, 3:4]                                     # (TN, 1)

    w = w_ref[...].astype(jnp.float32)
    w_point = w[0:4, :]                                    # (4, C)
    w_cluster = w[4:7, :]                                  # (3, C)
    w_center = w[7:10, :]                                  # (3, C)
    bias = w[10:11, :]                                     # (1, C)

    # Mean of xyz over points (padded point slots are zero, so a plain sum over P
    # matches torch's sum / voxel_num_points — exact division kept for fidelity;
    # it is only (TN, 3) elements so not worth the approx-reciprocal path).
    xyz_sum = jnp.sum(feat[:, :, 0:3], axis=1)             # (TN, 3)
    points_mean = xyz_sum / npts                            # (TN, 3)

    # Algebraic refactor of the PFN linear over the 10-dim augmented feature:
    #   [raw | xyz-mean | xyz-center] @ W_eff
    # = raw @ W_point  -  mean @ W_cluster  -  center @ W_center
    y_pt = jnp.dot(feat.reshape(tn * p, cr), w_point,
                   preferred_element_type=jnp.float32)      # (TN*P, C)  MXU
    y_vox = -(jnp.dot(points_mean, w_cluster, preferred_element_type=jnp.float32)
              + jnp.dot(center, w_center, preferred_element_type=jnp.float32))  # (TN, C)

    y = y_pt.reshape(tn, p, c) + y_vox[:, None, :]          # (TN, P, C)

    # Mask padded point slots BEFORE the (BN-folded) bias, exactly like the PyTorch
    # code (masked rows still contribute relu(bias) to the max).
    point_idx = lax.broadcasted_iota(jnp.int32, (tn, p), 1)
    valid = (point_idx < npts.astype(jnp.int32)).astype(jnp.float32)   # (TN, P)
    y = y * valid[:, :, None] + bias[None, :, :]

    y = jnp.maximum(y, 0.0)                                  # ReLU
    out_ref[...] = jnp.max(y, axis=1).astype(out_ref.dtype)  # max over points


def pillar_vfe_forward(voxel_features, voxel_num_points, voxel_coords,
                       linear_weight, bn_gamma, bn_beta, bn_mean, bn_var,
                       *, voxel_size, point_cloud_range, bn_eps=1e-3,
                       tile_n=256):
    """voxel_features: (N, P, 4); voxel_num_points: (N,); voxel_coords: (N, 4) [b,z,y,x];
    linear_weight: (C_out, 10); bn_*: (C_out,). Returns pillar_features (N, C_out)."""
    n, p, cr = voxel_features.shape
    assert cr == 4, "raw point features expected as (x, y, z, intensity)"
    c_out = linear_weight.shape[0]

    vx, vy, vz = (float(v) for v in voxel_size)
    x_off = vx / 2.0 + float(point_cloud_range[0])
    y_off = vy / 2.0 + float(point_cloud_range[1])
    z_off = vz / 2.0 + float(point_cloud_range[2])

    # Fold inference-mode BatchNorm into the (bias-free) linear, then fold the shared
    # xyz columns of raw / cluster / center into one per-point weight.
    scale = (bn_gamma / jnp.sqrt(bn_var + bn_eps)).astype(jnp.float32)      # (C,)
    w_eff = linear_weight.astype(jnp.float32).T * scale[None, :]            # (10, C)
    b_eff = (bn_beta - bn_mean * scale).astype(jnp.float32)                 # (C,)
    w_raw, w_cluster, w_center = w_eff[0:4], w_eff[4:7], w_eff[7:10]
    w_point = w_raw.at[0:3].add(w_cluster + w_center)                       # (4, C)
    params = jnp.concatenate(
        [w_point, w_cluster, w_center, b_eff[None, :]], axis=0)             # (11, C)

    # One consolidated per-pillar aux array: [center_x, center_y, center_z, npts].
    cf = voxel_coords.astype(jnp.float32)
    centers = jnp.stack([cf[:, 3] * vx + x_off,
                         cf[:, 2] * vy + y_off,
                         cf[:, 1] * vz + z_off], axis=1)                    # (N, 3)
    npts_f = voxel_num_points.astype(jnp.float32)[:, None]                  # (N, 1)
    aux = jnp.concatenate([centers, npts_f], axis=1)                        # (N, 4)

    # Tile the pillar axis; pad instead of asserting divisibility.
    tile_n = max(8, _round_up(min(int(tile_n), _round_up(n, 8)), 8))
    n_pad = _round_up(n, tile_n)
    if n_pad != n:
        pad = n_pad - n
        voxel_features = jnp.pad(voxel_features, ((0, pad), (0, 0), (0, 0)))
        aux_pad = jnp.concatenate(
            [jnp.zeros((pad, 3), jnp.float32), jnp.ones((pad, 1), jnp.float32)], axis=1)
        aux = jnp.concatenate([aux, aux_pad], axis=0)   # padded pillars: npts=1 (no 0/0)

    out = pl.pallas_call(
        _pillar_vfe_kernel,
        out_shape=jax.ShapeDtypeStruct((n_pad, c_out), voxel_features.dtype),
        grid_spec=pltpu.PrefetchScalarGridSpec(
            num_scalar_prefetch=0,
            grid=(n_pad // tile_n,),
            in_specs=[
                pl.BlockSpec((tile_n, p, cr), lambda i: (i, 0, 0)),
                pl.BlockSpec((tile_n, 4), lambda i: (i, 0)),
                pl.BlockSpec((11, c_out), lambda i: (0, 0)),
            ],
            out_specs=pl.BlockSpec((tile_n, c_out), lambda i: (i, 0)),
        ),
        compiler_params=pltpu.CompilerParams(
            dimension_semantics=("parallel",)),
    )(voxel_features, aux, params)
    return out[:n]


def _pillar_vfe_reference(voxel_features, voxel_num_points, coords,
                          linear_weight, bn_gamma, bn_beta, bn_mean, bn_var,
                          voxel_size, point_cloud_range, bn_eps=1e-3):
    """Pure-JAX mirror of the PyTorch PillarVFE.forward (inference-mode BN)."""
    vf = voxel_features.astype(jnp.float32)
    n, p, _ = vf.shape
    vx, vy, vz = (float(v) for v in voxel_size)
    x_off = vx / 2.0 + float(point_cloud_range[0])
    y_off = vy / 2.0 + float(point_cloud_range[1])
    z_off = vz / 2.0 + float(point_cloud_range[2])
    npts = voxel_num_points.astype(jnp.float32)
    points_mean = vf[:, :, :3].sum(axis=1, keepdims=True) / npts[:, None, None]
    f_cluster = vf[:, :, :3] - points_mean
    cf = coords.astype(jnp.float32)
    f_center = jnp.stack([
        vf[:, :, 0] - (cf[:, 3][:, None] * vx + x_off),
        vf[:, :, 1] - (cf[:, 2][:, None] * vy + y_off),
        vf[:, :, 2] - (cf[:, 1][:, None] * vz + z_off)], axis=-1)
    features = jnp.concatenate([vf, f_cluster, f_center], axis=-1)          # (N,P,10)
    mask = (jnp.arange(p)[None, :] < voxel_num_points[:, None]).astype(jnp.float32)
    features = features * mask[:, :, None]
    x = features @ linear_weight.astype(jnp.float32).T                      # (N,P,C)
    scale = bn_gamma / jnp.sqrt(bn_var + bn_eps)
    x = (x - bn_mean) * scale + bn_beta
    x = jnp.maximum(x, 0.0)
    return jnp.max(x, axis=1)


if __name__ == "__main__":
    key = jax.random.PRNGKey(0)
    ks = jax.random.split(key, 8)

    num_voxels = 20          # not a multiple of 8 -> exercises the padding path
    max_points = 8           # P (max points per pillar)
    c_out = 64               # NUM_FILTERS = [64] -> single PFNLayer, last_layer=True
    c_in = 10                # 4 raw + 3 cluster + 3 center

    voxel_size = (0.16, 0.16, 4.0)
    point_cloud_range = (0.0, -39.68, -3.0, 69.12, 39.68, 1.0)

    voxel_num_points = jax.random.randint(
        ks[0], (num_voxels,), minval=1, maxval=max_points + 1, dtype=jnp.int32)
    voxel_coords = jnp.stack([
        jax.random.randint(ks[1], (num_voxels,), 0, 2),      # batch idx
        jnp.zeros((num_voxels,), jnp.int32),                 # z idx (pillars)
        jax.random.randint(ks[2], (num_voxels,), 0, 496),    # y idx
        jax.random.randint(ks[3], (num_voxels,), 0, 432),    # x idx
    ], axis=1).astype(jnp.int32)

    # Raw per-point features (x, y, z, intensity); padded point slots zeroed,
    # as the OpenPCDet voxel generator provides.
    xyz = jax.random.uniform(
        ks[4], (num_voxels, max_points, 3),
        minval=jnp.array([0.0, -39.68, -3.0]),
        maxval=jnp.array([69.12, 39.68, 1.0]), dtype=jnp.float32)
    intensity = jax.random.uniform(ks[5], (num_voxels, max_points, 1), dtype=jnp.float32)
    raw = jnp.concatenate([xyz, intensity], axis=-1)
    valid = (jnp.arange(max_points)[None, :, None]
             < voxel_num_points[:, None, None]).astype(jnp.float32)
    voxel_features = raw * valid                                         # (N, P, 4)

    # PFNLayer parameters: Linear(10 -> 64, bias=False) + BatchNorm1d(64) running stats.
    w_lin = 0.3 * jax.random.normal(ks[6], (c_out, c_in), dtype=jnp.float32)
    kb = jax.random.split(ks[7], 4)
    bn_gamma = 1.0 + 0.2 * jax.random.normal(kb[0], (c_out,), dtype=jnp.float32)
    bn_beta = 0.1 * jax.random.normal(kb[1], (c_out,), dtype=jnp.float32)
    bn_mean = 0.1 * jax.random.normal(kb[2], (c_out,), dtype=jnp.float32)
    bn_var = 0.5 + jax.random.uniform(kb[3], (c_out,), dtype=jnp.float32)

    out = pillar_vfe_forward(
        voxel_features, voxel_num_points, voxel_coords,
        w_lin, bn_gamma, bn_beta, bn_mean, bn_var,
        voxel_size=voxel_size, point_cloud_range=point_cloud_range)
    out = jax.block_until_ready(out)

    ref = _pillar_vfe_reference(
        voxel_features, voxel_num_points, voxel_coords,
        w_lin, bn_gamma, bn_beta, bn_mean, bn_var,
        voxel_size, point_cloud_range)

    assert out.shape == (num_voxels, c_out)
    assert jnp.allclose(out, ref, atol=2e-3, rtol=2e-3), float(jnp.max(jnp.abs(out - ref)))

    print("KERNEL_OK")
</pallas_src>

<mosaic_0001>
module attributes {stable_mosaic.version = 11 : i64} {
  func.func @_pillar_vfe_kernel(%arg0: i32, %arg1: memref<24x8x4xf32, #tpu.memory_space<vmem>>, %arg2: memref<24x4xf32, #tpu.memory_space<vmem>>, %arg3: memref<11x64xf32, #tpu.memory_space<vmem>>, %arg4: memref<24x64xf32, #tpu.memory_space<vmem>>) attributes {dimension_semantics = [#tpu.dimension_semantics<parallel>], iteration_bounds = array<i64: 1>, scalar_prefetch = 0 : i64, scratch_operands = 0 : i64, tpu.core_type = #tpu.core_type<tc>, window_params = [{transform_indices = @transform_0, window_bounds = array<i64: 24, 8, 4>}, {transform_indices = @transform_1, window_bounds = array<i64: 24, 4>}, {pipeline_mode = #tpu.pipeline_mode<synchronous>, transform_indices = @transform_2, window_bounds = array<i64: 11, 64>}, {transform_indices = @transform_3, window_bounds = array<i64: 24, 64>}]} {
    %c0 = arith.constant 0 : index
    %c0_0 = arith.constant 0 : index
    %c0_1 = arith.constant 0 : index
    %0 = vector.load %arg1[%c0, %c0_0, %c0_1] : memref<24x8x4xf32, #tpu.memory_space<vmem>>, vector<24x8x4xf32>
    %c0_2 = arith.constant 0 : index
    %c0_3 = arith.constant 0 : index
    %1 = vector.load %arg2[%c0_2, %c0_3] : memref<24x4xf32, #tpu.memory_space<vmem>>, vector<24x4xf32>
    %2 = vector.extract_strided_slice %1 {offsets = [0, 0], sizes = [24, 3], strides = [1, 1]} : vector<24x4xf32> to vector<24x3xf32>
    %3 = vector.extract_strided_slice %1 {offsets = [0, 3], sizes = [24, 1], strides = [1, 1]} : vector<24x4xf32> to vector<24x1xf32>
    %c0_4 = arith.constant 0 : index
    %c0_5 = arith.constant 0 : index
    %4 = vector.load %arg3[%c0_4, %c0_5] : memref<11x64xf32, #tpu.memory_space<vmem>>, vector<11x64xf32>
    %5 = vector.extract_strided_slice %4 {offsets = [0, 0], sizes = [4, 64], strides = [1, 1]} : vector<11x64xf32> to vector<4x64xf32>
    %6 = vector.extract_strided_slice %4 {offsets = [4, 0], sizes = [3, 64], strides = [1, 1]} : vector<11x64xf32> to vector<3x64xf32>
    %7 = vector.extract_strided_slice %4 {offsets = [7, 0], sizes = [3, 64], strides = [1, 1]} : vector<11x64xf32> to vector<3x64xf32>
    %8 = vector.extract_strided_slice %4 {offsets = [10, 0], sizes = [1, 64], strides = [1, 1]} : vector<11x64xf32> to vector<1x64xf32>
    %9 = vector.extract_strided_slice %0 {offsets = [0, 0, 0], sizes = [24, 8, 3], strides = [1, 1, 1]} : vector<24x8x4xf32> to vector<24x8x3xf32>
    %cst = arith.constant dense<0.000000e+00> : vector<24x3xf32>
    %10 = vector.multi_reduction <add>, %9, %cst [1] : vector<24x8x3xf32> to vector<24x3xf32>
    %11 = vector.broadcast %3 : vector<24x1xf32> to vector<24x3xf32>
    %12 = arith.divf %10, %11 : vector<24x3xf32>
    %13 = vector.shape_cast %0 : vector<24x8x4xf32> to vector<192x4xf32>
    %cst_6 = arith.constant dense<0.000000e+00> : vector<192x64xf32>
    %14 = tpu.matmul %13, %5, %cst_6 {dimension_numbers = #tpu.dot_dimension_numbers<[1], [0], [0], [1], [0, 0, 1, 1], [], []>} : vector<192x4xf32>, vector<4x64xf32>, vector<192x64xf32> -> vector<192x64xf32>
    %cst_7 = arith.constant dense<0.000000e+00> : vector<24x64xf32>
    %15 = tpu.matmul %12, %6, %cst_7 {dimension_numbers = #tpu.dot_dimension_numbers<[1], [0], [0], [1], [0, 0, 1, 1], [], []>} : vector<24x3xf32>, vector<3x64xf32>, vector<24x64xf32> -> vector<24x64xf32>
    %cst_8 = arith.constant dense<0.000000e+00> : vector<24x64xf32>
    %16 = tpu.matmul %2, %7, %cst_8 {dimension_numbers = #tpu.dot_dimension_numbers<[1], [0], [0], [1], [0, 0, 1, 1], [], []>} : vector<24x3xf32>, vector<3x64xf32>, vector<24x64xf32> -> vector<24x64xf32>
    %17 = arith.addf %15, %16 : vector<24x64xf32>
    %cst_9 = arith.constant 0.000000e+00 : f32
    %18 = vector.broadcast %cst_9 : f32 to vector<24x64xf32>
    %19 = arith.subf %18, %17 : vector<24x64xf32>
    %20 = vector.shape_cast %14 : vector<192x64xf32> to vector<24x8x64xf32>
    %21 = vector.shape_cast %19 : vector<24x64xf32> to vector<24x1x64xf32>
    %22 = vector.broadcast %21 : vector<24x1x64xf32> to vector<24x8x64xf32>
    %23 = arith.addf %20, %22 : vector<24x8x64xf32>
    %24 = tpu.iota {dimensions = array<i32: 1>} : vector<24x8xi32>
    %25 = arith.fptosi %3 : vector<24x1xf32> to vector<24x1xi32>
    %26 = vector.broadcast %25 : vector<24x1xi32> to vector<24x8xi32>
    %27 = arith.cmpi slt, %24, %26 : vector<24x8xi32>
    %28 = arith.extui %27 : vector<24x8xi1> to vector<24x8xi32>
    %29 = arith.sitofp %28 : vector<24x8xi32> to vector<24x8xf32>
    %30 = vector.shape_cast %29 : vector<24x8xf32> to vector<24x8x1xf32>
    %31 = vector.broadcast %30 : vector<24x8x1xf32> to vector<24x8x64xf32>
    %32 = arith.mulf %23, %31 : vector<24x8x64xf32>
    %33 = vector.shape_cast %8 : vector<1x64xf32> to vector<1x1x64xf32>
    %34 = vector.broadcast %33 : vector<1x1x64xf32> to vector<24x8x64xf32>
    %35 = arith.addf %32, %34 : vector<24x8x64xf32>
    %cst_10 = arith.constant 0.000000e+00 : f32
    %36 = vector.broadcast %cst_10 : f32 to vector<24x8x64xf32>
    %37 = arith.maximumf %35, %36 : vector<24x8x64xf32>
    %cst_11 = arith.constant dense<0xFF800000> : vector<24x64xf32>
    %38 = vector.multi_reduction <maximumf>, %37, %cst_11 [1] : vector<24x8x64xf32> to vector<24x64xf32>
    %c0_12 = arith.constant 0 : index
    %c0_13 = arith.constant 0 : index
    %39 = vector.load %arg4[%c0_12, %c0_13] : memref<24x64xf32, #tpu.memory_space<vmem>>, vector<24x64xf32>
    tpu.vector_store %arg4[%c0_12, %c0_13], %38 {strides = array<i32>} : memref<24x64xf32, #tpu.memory_space<vmem>>, vector<24x64xf32>,
    return
  }
  func.func @transform_0(%arg0: i32) -> (i32, i32, i32) {
    %c0_i32 = arith.constant 0 : i32
    %c0_i32_0 = arith.constant 0 : i32
    %c0_i32_1 = arith.constant 0 : i32
    return %arg0, %c0_i32, %c0_i32_0 : i32, i32, i32
  }
  func.func @transform_1(%arg0: i32) -> (i32, i32) {
    %c0_i32 = arith.constant 0 : i32
    %c0_i32_0 = arith.constant 0 : i32
    return %arg0, %c0_i32 : i32, i32
  }
  func.func @transform_2(%arg0: i32) -> (i32, i32) {
    %c0_i32 = arith.constant 0 : i32
    %c0_i32_0 = arith.constant 0 : i32
    %c0_i32_1 = arith.constant 0 : i32
    return %c0_i32, %c0_i32_0 : i32, i32
  }
  func.func @transform_3(%arg0: i32) -> (i32, i32) {
    %c0_i32 = arith.constant 0 : i32
    %c0_i32_0 = arith.constant 0 : i32
    return %arg0, %c0_i32 : i32, i32
  }
}

</mosaic_0001>

<llo_original>
// kernel: tpu_custom_call.1
$region0: #{tpu_custom_call.1}
  #allocation0 [shape = 'u32[]', space=smem, size = 0x4, offset = 0x4, fixed_abs, tag = 'smem constant byte address 0x4 - core index']
  #allocation1 [shape = 'u32[144,128]{1,0:T(1,128)}', space=vmem, size = 0x12000, scoped, tag = 'internal scratch']
  %s0 = inlined_call_operand.vmem [shape: f32[24,8,4], index: 0, kind: input, shape index: {}]
  %s1 = inlined_call_operand.vmem [shape: f32[24,4], index: 1, kind: input, shape index: {}]
  %s2 = inlined_call_operand.vmem [shape: f32[11,64], index: 2, kind: input, shape index: {}]
  %s3 = inlined_call_operand.hbm [shape: f32[24,64], index: 3, kind: output, shape index: {}]
  %s4 = sld [smem:[#allocation0]]
  $region22: #{tpu_custom_call.1} parent=0
    _
  %s6 = ssub.s32 1, %s4
  %s7 = scalar_select 0, %s6, %s4
  $region1: #{tpu_custom_call.1} parent=0
    #allocation2 [shape = 'u8[12288]{0}', space=vmem, size = 0x3000, scoped, tag = 'output window, operand 0, single buffered']
    #allocation3 [shape = 's32[1]{0}', space=sflag, size = 0x4, scoped, tag = 'scoped memory for tpu_custom_call.1']
    %8 = vsyncpa [#allocation3], 0
    // Predicated region
    $region2: #{tpu_custom_call.1} parent=1 // pred_check
      _
    $region3: #{tpu_custom_call.1} parent=1 // pred_check_branch
      %10 = sbr.rel (0) target = $region5
    $region4: #{tpu_custom_call.1} parent=1 // pred_region
      _
    $region5: #{tpu_custom_call.1} parent=1 // pred_fallthru
      _
    // Predicated region
    $region6: #{tpu_custom_call.1} parent=1 // pred_check
      _
    $region7: #{tpu_custom_call.1} parent=1 // pred_check_branch
      %12 = sbr.rel (0) target = $region9
    $region8: #{tpu_custom_call.1} parent=1 // pred_region
      _
    $region9: #{tpu_custom_call.1} parent=1 // pred_fallthru
      _
    // Predicated region
    $region10: #{tpu_custom_call.1} parent=1 // pred_check
      _
    $region11: #{tpu_custom_call.1} parent=1 // pred_check_branch
      %14 = sbr.rel (0) target = $region13
    $region12: #{tpu_custom_call.1} parent=1 // pred_region
      _
    $region13: #{tpu_custom_call.1} parent=1 // pred_fallthru
      _
    %v15 = vld [vmem:[%s0] sm:$0xff]
    %v16 = vld [vmem:[%s0 + $0x8] sm:$0xff]
    %v17 = vld [vmem:[%s0 + $0x10] sm:$0xff]
    %v18 = vld [vmem:[%s0 + $0x18] sm:$0xff]
    %v19 = vld [vmem:[%s0 + $0x20] sm:$0xff]
    %v20 = vld [vmem:[%s0 + $0x28] sm:$0xff]
    %v21 = vld [vmem:[%s0 + $0x30] sm:$0xff]
    %v22 = vld [vmem:[%s0 + $0x38] sm:$0xff]
    %v23 = vld [vmem:[%s0 + $0x40] sm:$0xff]
    %v24 = vld [vmem:[%s0 + $0x48] sm:$0xff]
    %v25 = vld [vmem:[%s0 + $0x50] sm:$0xff]
    %v26 = vld [vmem:[%s0 + $0x58] sm:$0xff]
    %v27 = vld [vmem:[%s0 + $0x60] sm:$0xff]
    %v28 = vld [vmem:[%s0 + $0x68] sm:$0xff]
    %v29 = vld [vmem:[%s0 + $0x70] sm:$0xff]
    %v30 = vld [vmem:[%s0 + $0x78] sm:$0xff]
    %v31 = vld [vmem:[%s0 + $0x80] sm:$0xff]
    %v32 = vld [vmem:[%s0 + $0x88] sm:$0xff]
    %v33 = vld [vmem:[%s0 + $0x90] sm:$0xff]
    %v34 = vld [vmem:[%s0 + $0x98] sm:$0xff]
    %v35 = vld [vmem:[%s0 + $0xa0] sm:$0xff]
    %v36 = vld [vmem:[%s0 + $0xa8] sm:$0xff]
    %v37 = vld [vmem:[%s0 + $0xb0] sm:$0xff]
    %v38 = vld [vmem:[%s0 + $0xb8] sm:$0xff]
    %v39 = vld [vmem:[%s1] sm:$0xff]
    %v40 = vld [vmem:[%s1 + $0x8] sm:$0xff]
    %v41 = vld [vmem:[%s1 + $0x10] sm:$0xff]
    %v42 = vld [vmem:[%s2] sm:$0xff]
    %v43 = vld [vmem:[%s2 + $0x8] sm:$0x7]
    %vm44 = vcmask 23552
    %v45 = vsel %vm44, %v15, 0.0
    %v46 = vrot.slane %v45, 4
    %v47 = vadd.f32 %v45, %v46
    %v48 = vrot.slane %v47, 2
    %v49 = vadd.f32 %v47, %v48
    %v50 = vrot.slane %v49, 1
    %v51 = vadd.f32 %v49, %v50
    %v52 = vsel %vm44, %v16, 0.0
    %v53 = vrot.slane %v52, 4
    %v54 = vadd.f32 %v52, %v53
    %v55 = vrot.slane %v54, 2
    %v56 = vadd.f32 %v54, %v55
    %v57 = vrot.slane %v56, 1
    %v58 = vadd.f32 %v56, %v57
    %v59 = vsel %vm44, %v17, 0.0
    %v60 = vrot.slane %v59, 4
    %v61 = vadd.f32 %v59, %v60
    %v62 = vrot.slane %v61, 2
    %v63 = vadd.f32 %v61, %v62
    %v64 = vrot.slane %v63, 1
    %v65 = vadd.f32 %v63, %v64
    %v66 = vsel %vm44, %v18, 0.0
    %v67 = vrot.slane %v66, 4
    %v68 = vadd.f32 %v66, %v67
    %v69 = vrot.slane %v68, 2
    %v70 = vadd.f32 %v68, %v69
    %v71 = vrot.slane %v70, 1
    %v72 = vadd.f32 %v70, %v71
    %v73 = vsel %vm44, %v19, 0.0
    %v74 = vrot.slane %v73, 4
    %v75 = vadd.f32 %v73, %v74
    %v76 = vrot.slane %v75, 2
    %v77 = vadd.f32 %v75, %v76
    %v78 = vrot.slane %v77, 1
    %v79 = vadd.f32 %v77, %v78
    %v80 = vsel %vm44, %v20, 0.0
    %v81 = vrot.slane %v80, 4
    %v82 = vadd.f32 %v80, %v81
    %v83 = vrot.slane %v82, 2
    %v84 = vadd.f32 %v82, %v83
    %v85 = vrot.slane %v84, 1
    %v86 = vadd.f32 %v84, %v85
    %v87 = vsel %vm44, %v21, 0.0
    %v88 = vrot.slane %v87, 4
    %v89 = vadd.f32 %v87, %v88
    %v90 = vrot.slane %v89, 2
    %v91 = vadd.f32 %v89, %v90
    %v92 = vrot.slane %v91, 1
    %v93 = vadd.f32 %v91, %v92
    %v94 = vsel %vm44, %v22, 0.0
    %v95 = vrot.slane %v94, 4
    %v96 = vadd.f32 %v94, %v95
    %v97 = vrot.slane %v96, 2
    %v98 = vadd.f32 %v96, %v97
    %v99 = vrot.slane %v98, 1
    %v100 = vadd.f32 %v98, %v99
    %v101 = vsel %vm44, %v23, 0.0
    %v102 = vrot.slane %v101, 4
    %v103 = vadd.f32 %v101, %v102
    %v104 = vrot.slane %v103, 2
    %v105 = vadd.f32 %v103, %v104
    %v106 = vrot.slane %v105, 1
    %v107 = vadd.f32 %v105, %v106
    %v108 = vsel %vm44, %v24, 0.0
    %v109 = vrot.slane %v108, 4
    %v110 = vadd.f32 %v108, %v109
    %v111 = vrot.slane %v110, 2
    %v112 = vadd.f32 %v110, %v111
    %v113 = vrot.slane %v112, 1
    %v114 = vadd.f32 %v112, %v113
    %v115 = vsel %vm44, %v25, 0.0
    %v116 = vrot.slane %v115, 4
    %v117 = vadd.f32 %v115, %v116
    %v118 = vrot.slane %v117, 2
    %v119 = vadd.f32 %v117, %v118
    %v120 = vrot.slane %v119, 1
    %v121 = vadd.f32 %v119, %v120
    %v122 = vsel %vm44, %v26, 0.0
    %v123 = vrot.slane %v122, 4
    %v124 = vadd.f32 %v122, %v123
    %v125 = vrot.slane %v124, 2
    %v126 = vadd.f32 %v124, %v125
    %v127 = vrot.slane %v126, 1
    %v128 = vadd.f32 %v126, %v127
    %v129 = vsel %vm44, %v27, 0.0
    %v130 = vrot.slane %v129, 4
    %v131 = vadd.f32 %v129, %v130
    %v132 = vrot.slane %v131, 2
    %v133 = vadd.f32 %v131, %v132
    %v134 = vrot.slane %v133, 1
    %v135 = vadd.f32 %v133, %v134
    %v136 = vsel %vm44, %v28, 0.0
    %v137 = vrot.slane %v136, 4
    %v138 = vadd.f32 %v136, %v137
    %v139 = vrot.slane %v138, 2
    %v140 = vadd.f32 %v138, %v139
    %v141 = vrot.slane %v140, 1
    %v142 = vadd.f32 %v140, %v141
    %v143 = vsel %vm44, %v29, 0.0
    %v144 = vrot.slane %v143, 4
    %v145 = vadd.f32 %v143, %v144
    %v146 = vrot.slane %v145, 2
    %v147 = vadd.f32 %v145, %v146
    %v148 = vrot.slane %v147, 1
    %v149 = vadd.f32 %v147, %v148
    %v150 = vsel %vm44, %v30, 0.0
    %v151 = vrot.slane %v150, 4
    %v152 = vadd.f32 %v150, %v151
    %v153 = vrot.slane %v152, 2
    %v154 = vadd.f32 %v152, %v153
    %v155 = vrot.slane %v154, 1
    %v156 = vadd.f32 %v154, %v155
    %v157 = vsel %vm44, %v31, 0.0
    %v158 = vrot.slane %v157, 4
    %v159 = vadd.f32 %v157, %v158
    %v160 = vrot.slane %v159, 2
    %v161 = vadd.f32 %v159, %v160
    %v162 = vrot.slane %v161, 1
    %v163 = vadd.f32 %v161, %v162
    %v164 = vsel %vm44, %v32, 0.0
    %v165 = vrot.slane %v164, 4
    %v166 = vadd.f32 %v164, %v165
    %v167 = vrot.slane %v166, 2
    %v168 = vadd.f32 %v166, %v167
    %v169 = vrot.slane %v168, 1
    %v170 = vadd.f32 %v168, %v169
    %v171 = vsel %vm44, %v33, 0.0
    %v172 = vrot.slane %v171, 4
    %v173 = vadd.f32 %v171, %v172
    %v174 = vrot.slane %v173, 2
    %v175 = vadd.f32 %v173, %v174
    %v176 = vrot.slane %v175, 1
    %v177 = vadd.f32 %v175, %v176
    %v178 = vsel %vm44, %v34, 0.0
    %v179 = vrot.slane %v178, 4
    %v180 = vadd.f32 %v178, %v179
    %v181 = vrot.slane %v180, 2
    %v182 = vadd.f32 %v180, %v181
    %v183 = vrot.slane %v182, 1
    %v184 = vadd.f32 %v182, %v183
    %v185 = vsel %vm44, %v35, 0.0
    %v186 = vrot.slane %v185, 4
    %v187 = vadd.f32 %v185, %v186
    %v188 = vrot.slane %v187, 2
    %v189 = vadd.f32 %v187, %v188
    %v190 = vrot.slane %v189, 1
    %v191 = vadd.f32 %v189, %v190
    %v192 = vsel %vm44, %v36, 0.0
    %v193 = vrot.slane %v192, 4
    %v194 = vadd.f32 %v192, %v193
    %v195 = vrot.slane %v194, 2
    %v196 = vadd.f32 %v194, %v195
    %v197 = vrot.slane %v196, 1
    %v198 = vadd.f32 %v196, %v197
    %v199 = vsel %vm44, %v37, 0.0
    %v200 = vrot.slane %v199, 4
    %v201 = vadd.f32 %v199, %v200
    %v202 = vrot.slane %v201, 2
    %v203 = vadd.f32 %v201, %v202
    %v204 = vrot.slane %v203, 1
    %v205 = vadd.f32 %v203, %v204
    %v206 = vsel %vm44, %v38, 0.0
    %v207 = vrot.slane %v206, 4
    %v208 = vadd.f32 %v206, %v207
    %v209 = vrot.slane %v208, 2
    %v210 = vadd.f32 %v208, %v209
    %v211 = vrot.slane %v210, 1
    %v212 = vadd.f32 %v210, %v211
    %214 = vset.pattern.permute.xlu0 3
    %215 = vperm.xlu0 %214, %v39
    %v216 = vpop.permute.xlu0 %215
    %218 = vset.pattern.permute.xlu0 3
    %219 = vperm.xlu0 %218, %v40
    %v220 = vpop.permute.xlu0 %219
    %222 = vset.pattern.permute.xlu0 3
    %223 = vperm.xlu0 %222, %v41
    %v224 = vpop.permute.xlu0 %223
    %v225 = vrot.slane %v216, 1
    %v226 = vrot.slane %v216, 2
    %v227 = vrot.slane %v216, 3
    %v228 = vrot.slane %v216, 4
    %v229 = vrot.slane %v216, 5
    %v230 = vrot.slane %v216, 6
    %v231 = vrot.slane %v216, 7
    %v232 = vrot.slane %v220, 1
    %v233 = vrot.slane %v220, 2
    %v234 = vrot.slane %v220, 3
    %v235 = vrot.slane %v220, 4
    %v236 = vrot.slane %v220, 5
    %v237 = vrot.slane %v220, 6
    %v238 = vrot.slane %v220, 7
    %v239 = vrot.slane %v224, 1
    %v240 = vrot.slane %v224, 2
    %v241 = vrot.slane %v224, 3
    %v242 = vrot.slane %v224, 4
    %v243 = vrot.slane %v224, 5
    %v244 = vrot.slane %v224, 6
    %v245 = vrot.slane %v224, 7
    %v270 = vrcp.pop %v216
    %v271 = vmul.f32 %v51, %v270
    %v272 = vrcp.pop %v225
    %v273 = vmul.f32 %v58, %v272
    %v274 = vrcp.pop %v226
    %v275 = vmul.f32 %v65, %v274
    %v276 = vrcp.pop %v227
    %v277 = vmul.f32 %v72, %v276
    %v278 = vrcp.pop %v228
    %v279 = vmul.f32 %v79, %v278
    %v280 = vrcp.pop %v229
    %v281 = vmul.f32 %v86, %v280
    %v282 = vrcp.pop %v230
    %v283 = vmul.f32 %v93, %v282
    %v284 = vrcp.pop %v231
    %v285 = vmul.f32 %v100, %v284
    %v286 = vrcp.pop %v220
    %v287 = vmul.f32 %v107, %v286
    %v288 = vrcp.pop %v232
    %v289 = vmul.f32 %v114, %v288
    %v290 = vrcp.pop %v233
    %v291 = vmul.f32 %v121, %v290
    %v292 = vrcp.pop %v234
    %v293 = vmul.f32 %v128, %v292
    %v294 = vrcp.pop %v235
    %v295 = vmul.f32 %v135, %v294
    %v296 = vrcp.pop %v236
    %v297 = vmul.f32 %v142, %v296
    %v298 = vrcp.pop %v237
    %v299 = vmul.f32 %v149, %v298
    %v300 = vrcp.pop %v238
    %v301 = vmul.f32 %v156, %v300
    %v302 = vrcp.pop %v224
    %v303 = vmul.f32 %v163, %v302
    %v304 = vrcp.pop %v239
    %v305 = vmul.f32 %v170, %v304
    %v306 = vrcp.pop %v240
    %v307 = vmul.f32 %v177, %v306
    %v308 = vrcp.pop %v241
    %v309 = vmul.f32 %v184, %v308
    %v310 = vrcp.pop %v242
    %v311 = vmul.f32 %v191, %v310
    %v312 = vrcp.pop %v243
    %v313 = vmul.f32 %v198, %v312
    %v314 = vrcp.pop %v244
    %v315 = vmul.f32 %v205, %v314
    %v316 = vrcp.pop %v245
    %v317 = vmul.f32 %v212, %v316
    %vm318 = vcmask 31744
    %v320 = vsel %vm318, %v15, 0
    %v323 = vsel %vm318, %v16, 0
    %v326 = vsel %vm318, %v17, 0
    %v329 = vsel %vm318, %v18, 0
    %v332 = vsel %vm318, %v19, 0
    %v335 = vsel %vm318, %v20, 0
    %v338 = vsel %vm318, %v21, 0
    %v341 = vsel %vm318, %v22, 0
    %v344 = vsel %vm318, %v23, 0
    %v347 = vsel %vm318, %v24, 0
    %v350 = vsel %vm318, %v25, 0
    %v353 = vsel %vm318, %v26, 0
    %v356 = vsel %vm318, %v27, 0
    %v359 = vsel %vm318, %v28, 0
    %v362 = vsel %vm318, %v29, 0
    %v365 = vsel %vm318, %v30, 0
    %v368 = vsel %vm318, %v31, 0
    %v371 = vsel %vm318, %v32, 0
    %v374 = vsel %vm318, %v33, 0
    %v377 = vsel %vm318, %v34, 0
    %v380 = vsel %vm318, %v35, 0
    %v383 = vsel %vm318, %v36, 0
    %v386 = vsel %vm318, %v37, 0
    %v389 = vsel %vm318, %v38, 0
    %vm391 = vcmask 1043456
    %v393 = vsel %vm391, %v42, 0
    %395 = vmatprep.subr.mxu0 0.0
    %396 = vmatpush1.msra.mxu0 %v393
    %397 = vmatprep.subr.mxu0 0.0
    %398 = vmatpush1.msra.mxu0 0.0
    %399 = vmatprep.subr.mxu0 0.0
    %400 = vmatpush1.msra.mxu0 0.0
    %401 = vmatprep.subr.mxu0 0.0
    %402 = vmatpush1.msra.mxu0 0.0
    %403 = vmatprep.subr.mxu0 0.0
    %404 = vmatpush1.msra.mxu0 0.0
    %405 = vmatprep.subr.mxu0 0.0
    %406 = vmatpush1.msra.mxu0 0.0
    %407 = vmatprep.subr.mxu0 0.0
    %408 = vmatpush1.msra.mxu0 0.0
    %409 = vmatprep.subr.mxu0 0.0
    %410 = vmatpush1.msra.mxu0 0.0
    %411 = vmatprep.subr.mxu0 0.0
    %412 = vmatpush1.msra.mxu0 0.0
    %413 = vmatprep.subr.mxu0 0.0
    %414 = vmatpush1.msra.mxu0 0.0
    %415 = vmatprep.subr.mxu0 0.0
    %416 = vmatpush1.msra.mxu0 0.0
    %417 = vmatprep.subr.mxu0 0.0
    %418 = vmatpush1.msra.mxu0 0.0
    %419 = vmatprep.subr.mxu0 0.0
    %420 = vmatpush1.msra.mxu0 0.0
    %421 = vmatprep.subr.mxu0 0.0
    %422 = vmatpush1.msra.mxu0 0.0
    %423 = vmatprep.subr.mxu0 0.0
    %424 = vmatpush1.msra.mxu0 0.0
    %425 = vmatprep.subr.mxu0 0.0
    %426 = vmatpush1.msra.mxu0 0.0
    %427 = vmatprep.subr.mxu0 0.0
    %428 = vmatpush1.msra.mxu0 0.0
    %429 = vmatprep.subr.mxu0 0.0
    %430 = vmatpush1.msra.mxu0 0.0
    %431 = vmatprep.subr.mxu0 0.0
    %432 = vmatpush1.msra.mxu0 0.0
    %433 = vmatprep.subr.mxu0 0.0
    %434 = vmatpush1.msra.mxu0 0.0
    %435 = vmatprep.subr.mxu0 0.0
    %436 = vmatpush1.msra.mxu0 0.0
    %437 = vmatprep.subr.mxu0 0.0
    %438 = vmatpush1.msra.mxu0 0.0
    %439 = vmatprep.subr.mxu0 0.0
    %440 = vmatpush1.msra.mxu0 0.0
    %441 = vmatprep.subr.mxu0 0.0
    %442 = vmatpush1.msra.mxu0 0.0
    %443 = vmatprep.subr.mxu0 0.0
    %444 = vmatpush1.msra.mxu0 0.0
    %445 = vmatprep.subr.mxu0 0.0
    %446 = vmatpush1.msra.mxu0 0.0
    %447 = vmatprep.subr.mxu0 0.0
    %448 = vmatpush1.msra.mxu0 0.0
    %449 = vmatprep.subr.mxu0 0.0
    %450 = vmatpush1.msra.mxu0 0.0
    %451 = vmatprep.subr.mxu0 0.0
    %452 = vmatpush1.msra.mxu0 0.0
    %453 = vmatprep.subr.mxu0 0.0
    %454 = vmatpush1.msra.mxu0 0.0
    %455 = vmatprep.subr.mxu0 0.0
    %456 = vmatpush1.msra.mxu0 0.0
    %457 = vmatprep.subr.mxu0 0.0
    %458 = vmatpush1.msra.mxu0 0.0
    %459 = vmatprep.mubr.f32.mxu0 0.0
    %460 = vmatmul.mubr.f32.gmra.mrb[0].mxu0 %v320
    %v461 = vpop.f32.mrb[0].mxu0
    %v462 = vadd.f32 0.0, %v461
    %v463 = vpop.f32.mrb[0].mxu0
    %464 = vmatprep.mubr.f32.mxu0 0.0
    %465 = vmatmul.mubr.f32.gmra.mrb[0].mxu0 %v323
    %v466 = vpop.f32.mrb[0].mxu0
    %v467 = vadd.f32 0.0, %v466
    %v468 = vpop.f32.mrb[0].mxu0
    %469 = vmatprep.mubr.f32.mxu0 0.0
    %470 = vmatmul.mubr.f32.gmra.mrb[0].mxu0 %v326
    %v471 = vpop.f32.mrb[0].mxu0
    %v472 = vadd.f32 0.0, %v471
    %v473 = vpop.f32.mrb[0].mxu0
    %474 = vmatprep.mubr.f32.mxu0 0.0
    %475 = vmatmul.mubr.f32.gmra.mrb[0].mxu0 %v329
    %v476 = vpop.f32.mrb[0].mxu0
    %v477 = vadd.f32 0.0, %v476
    %v478 = vpop.f32.mrb[0].mxu0
    %479 = vmatprep.mubr.f32.mxu0 0.0
    %480 = vmatmul.mubr.f32.gmra.mrb[0].mxu0 %v332
    %v481 = vpop.f32.mrb[0].mxu0
    %v482 = vadd.f32 0.0, %v481
    %v483 = vpop.f32.mrb[0].mxu0
    %484 = vmatprep.mubr.f32.mxu0 0.0
    %485 = vmatmul.mubr.f32.gmra.mrb[0].mxu0 %v335
    %v486 = vpop.f32.mrb[0].mxu0
    %v487 = vadd.f32 0.0, %v486
    %v488 = vpop.f32.mrb[0].mxu0
    %489 = vmatprep.mubr.f32.mxu0 0.0
    %490 = vmatmul.mubr.f32.gmra.mrb[0].mxu0 %v338
    %v491 = vpop.f32.mrb[0].mxu0
    %v492 = vadd.f32 0.0, %v491
    %v493 = vpop.f32.mrb[0].mxu0
    %494 = vmatprep.mubr.f32.mxu0 0.0
    %495 = vmatmul.mubr.f32.gmra.mrb[0].mxu0 %v341
    %v496 = vpop.f32.mrb[0].mxu0
    %v497 = vadd.f32 0.0, %v496
    %v498 = vpop.f32.mrb[0].mxu0
    %499 = vmatprep.mubr.f32.mxu0 0.0
    %500 = vmatmul.mubr.f32.gmra.mrb[0].mxu0 %v344
    %v501 = vpop.f32.mrb[0].mxu0
    %v502 = vadd.f32 0.0, %v501
    %v503 = vpop.f32.mrb[0].mxu0
    %504 = vmatprep.mubr.f32.mxu0 0.0
    %505 = vmatmul.mubr.f32.gmra.mrb[0].mxu0 %v347
    %v506 = vpop.f32.mrb[0].mxu0
    %v507 = vadd.f32 0.0, %v506
    %v508 = vpop.f32.mrb[0].mxu0
    %509 = vmatprep.mubr.f32.mxu0 0.0
    %510 = vmatmul.mubr.f32.gmra.mrb[0].mxu0 %v350
    %v511 = vpop.f32.mrb[0].mxu0
    %v512 = vadd.f32 0.0, %v511
    %v513 = vpop.f32.mrb[0].mxu0
    %514 = vmatprep.mubr.f32.mxu0 0.0
    %515 = vmatmul.mubr.f32.gmra.mrb[0].mxu0 %v353
    %v516 = vpop.f32.mrb[0].mxu0
    %v517 = vadd.f32 0.0, %v516
    %v518 = vpop.f32.mrb[0].mxu0
    %519 = vmatprep.mubr.f32.mxu0 0.0
    %520 = vmatmul.mubr.f32.gmra.mrb[0].mxu0 %v356
    %v521 = vpop.f32.mrb[0].mxu0
    %v522 = vadd.f32 0.0, %v521
    %v523 = vpop.f32.mrb[0].mxu0
    %524 = vmatprep.mubr.f32.mxu0 0.0
    %525 = vmatmul.mubr.f32.gmra.mrb[0].mxu0 %v359
    %v526 = vpop.f32.mrb[0].mxu0
    %v527 = vadd.f32 0.0, %v526
    %v528 = vpop.f32.mrb[0].mxu0
    %529 = vmatprep.mubr.f32.mxu0 0.0
    %530 = vmatmul.mubr.f32.gmra.mrb[0].mxu0 %v362
    %v531 = vpop.f32.mrb[0].mxu0
    %v532 = vadd.f32 0.0, %v531
    %v533 = vpop.f32.mrb[0].mxu0
    %534 = vmatprep.mubr.f32.mxu0 0.0
    %535 = vmatmul.mubr.f32.gmra.mrb[0].mxu0 %v365
    %v536 = vpop.f32.mrb[0].mxu0
    %v537 = vadd.f32 0.0, %v536
    %v538 = vpop.f32.mrb[0].mxu0
    %539 = vmatprep.mubr.f32.mxu0 0.0
    %540 = vmatmul.mubr.f32.gmra.mrb[0].mxu0 %v368
    %v541 = vpop.f32.mrb[0].mxu0
    %v542 = vadd.f32 0.0, %v541
    %v543 = vpop.f32.mrb[0].mxu0
    %544 = vmatprep.mubr.f32.mxu0 0.0
    %545 = vmatmul.mubr.f32.gmra.mrb[0].mxu0 %v371
    %v546 = vpop.f32.mrb[0].mxu0
    %v547 = vadd.f32 0.0, %v546
    %v548 = vpop.f32.mrb[0].mxu0
    %549 = vmatprep.mubr.f32.mxu0 0.0
    %550 = vmatmul.mubr.f32.gmra.mrb[0].mxu0 %v374
    %v551 = vpop.f32.mrb[0].mxu0
    %v552 = vadd.f32 0.0, %v551
    %v553 = vpop.f32.mrb[0].mxu0
    %554 = vmatprep.mubr.f32.mxu0 0.0
    %555 = vmatmul.mubr.f32.gmra.mrb[0].mxu0 %v377
    %v556 = vpop.f32.mrb[0].mxu0
    %v557 = vadd.f32 0.0, %v556
    %v558 = vpop.f32.mrb[0].mxu0
    %559 = vmatprep.mubr.f32.mxu0 0.0
    %560 = vmatmul.mubr.f32.gmra.mrb[0].mxu0 %v380
    %v561 = vpop.f32.mrb[0].mxu0
    %v562 = vadd.f32 0.0, %v561
    %v563 = vpop.f32.mrb[0].mxu0
    %564 = vmatprep.mubr.f32.mxu0 0.0
    %565 = vmatmul.mubr.f32.gmra.mrb[0].mxu0 %v383
    %v566 = vpop.f32.mrb[0].mxu0
    %v567 = vadd.f32 0.0, %v566
    %v568 = vpop.f32.mrb[0].mxu0
    %569 = vmatprep.mubr.f32.mxu0 0.0
    %570 = vmatmul.mubr.f32.gmra.mrb[0].mxu0 %v386
    %v571 = vpop.f32.mrb[0].mxu0
    %v572 = vadd.f32 0.0, %v571
    %v573 = vpop.f32.mrb[0].mxu0
    %574 = vmatprep.mubr.f32.mxu0 0.0
    %575 = vmatmul.mubr.f32.gmra.mrb[0].mxu0 %v389
    %v576 = vpop.f32.mrb[0].mxu0
    %v577 = vadd.f32 0.0, %v576
    %v578 = vpop.f32.mrb[0].mxu0
    %579 = vdwg.mxu0
    %vm581 = vcmask 1040384
    %v582 = vrot.slane %v42, 7
    %v583 = vrot.slane %v43, 7
    %v584 = vsel %vm581, %v582, %v583
    %v585 = vsel %vm44, %v39, 0
    %v587 = vsel %vm44, %v40, 0
    %v589 = vsel %vm44, %v41, 0
    %vm591 = vcmask 1042432
    %v592 = vsel %vm591, %v584, 0
    %594 = vmatprep.subr.mxu0 0.0
    %595 = vmatpush1.msra.mxu0 %v592
    %596 = vmatprep.subr.mxu0 0.0
    %597 = vmatpush1.msra.mxu0 0.0
    %598 = vmatprep.subr.mxu0 0.0
    %599 = vmatpush1.msra.mxu0 0.0
    %600 = vmatprep.subr.mxu0 0.0
    %601 = vmatpush1.msra.mxu0 0.0
    %602 = vmatprep.subr.mxu0 0.0
    %603 = vmatpush1.msra.mxu0 0.0
    %604 = vmatprep.subr.mxu0 0.0
    %605 = vmatpush1.msra.mxu0 0.0
    %606 = vmatprep.subr.mxu0 0.0
    %607 = vmatpush1.msra.mxu0 0.0
    %608 = vmatprep.subr.mxu0 0.0
    %609 = vmatpush1.msra.mxu0 0.0
    %610 = vmatprep.subr.mxu0 0.0
    %611 = vmatpush1.msra.mxu0 0.0
    %612 = vmatprep.subr.mxu0 0.0
    %613 = vmatpush1.msra.mxu0 0.0
    %614 = vmatprep.subr.mxu0 0.0
    %615 = vmatpush1.msra.mxu0 0.0
    %616 = vmatprep.subr.mxu0 0.0
    %617 = vmatpush1.msra.mxu0 0.0
    %618 = vmatprep.subr.mxu0 0.0
    %619 = vmatpush1.msra.mxu0 0.0
    %620 = vmatprep.subr.mxu0 0.0
    %621 = vmatpush1.msra.mxu0 0.0
    %622 = vmatprep.subr.mxu0 0.0
    %623 = vmatpush1.msra.mxu0 0.0
    %624 = vmatprep.subr.mxu0 0.0
    %625 = vmatpush1.msra.mxu0 0.0
    %626 = vmatprep.subr.mxu0 0.0
    %627 = vmatpush1.msra.mxu0 0.0
    %628 = vmatprep.subr.mxu0 0.0
    %629 = vmatpush1.msra.mxu0 0.0
    %630 = vmatprep.subr.mxu0 0.0
    %631 = vmatpush1.msra.mxu0 0.0
    %632 = vmatprep.subr.mxu0 0.0
    %633 = vmatpush1.msra.mxu0 0.0
    %634 = vmatprep.subr.mxu0 0.0
    %635 = vmatpush1.msra.mxu0 0.0
    %636 = vmatprep.subr.mxu0 0.0
    %637 = vmatpush1.msra.mxu0 0.0
    %638 = vmatprep.subr.mxu0 0.0
    %639 = vmatpush1.msra.mxu0 0.0
    %640 = vmatprep.subr.mxu0 0.0
    %641 = vmatpush1.msra.mxu0 0.0
    %642 = vmatprep.subr.mxu0 0.0
    %643 = vmatpush1.msra.mxu0 0.0
    %644 = vmatprep.subr.mxu0 0.0
    %645 = vmatpush1.msra.mxu0 0.0
    %646 = vmatprep.subr.mxu0 0.0
    %647 = vmatpush1.msra.mxu0 0.0
    %648 = vmatprep.subr.mxu0 0.0
    %649 = vmatpush1.msra.mxu0 0.0
    %650 = vmatprep.subr.mxu0 0.0
    %651 = vmatpush1.msra.mxu0 0.0
    %652 = vmatprep.subr.mxu0 0.0
    %653 = vmatpush1.msra.mxu0 0.0
    %654 = vmatprep.subr.mxu0 0.0
    %655 = vmatpush1.msra.mxu0 0.0
    %656 = vmatprep.subr.mxu0 0.0
    %657 = vmatpush1.msra.mxu0 0.0
    %658 = vmatprep.mubr.f32.mxu0 0.0
    %659 = vmatmul.mubr.f32.gmra.mrb[0].mxu0 %v585
    %v660 = vpop.f32.mrb[0].mxu0
    %v661 = vadd.f32 0.0, %v660
    %v662 = vpop.f32.mrb[0].mxu0
    %663 = vmatprep.mubr.f32.mxu0 0.0
    %664 = vmatmul.mubr.f32.gmra.mrb[0].mxu0 %v587
    %v665 = vpop.f32.mrb[0].mxu0
    %v666 = vadd.f32 0.0, %v665
    %v667 = vpop.f32.mrb[0].mxu0
    %668 = vmatprep.mubr.f32.mxu0 0.0
    %669 = vmatmul.mubr.f32.gmra.mrb[0].mxu0 %v589
    %v670 = vpop.f32.mrb[0].mxu0
    %v671 = vadd.f32 0.0, %v670
    %v672 = vpop.f32.mrb[0].mxu0
    %673 = vdwg.mxu0
    %v698 = vrot.slane %v273, 7
    %vm699 = vcmask 1041409
    %v700 = vsel %vm699, %v698, %v271
    %v701 = vrot.slane %v275, 6
    %vm702 = vcmask 1042434
    %v703 = vsel %vm702, %v701, %v700
    %v704 = vrot.slane %v277, 5
    %vm705 = vcmask 1043459
    %v706 = vsel %vm705, %v704, %v703
    %v707 = vrot.slane %v279, 4
    %vm708 = vcmask 1044484
    %v709 = vsel %vm708, %v707, %v706
    %v710 = vrot.slane %v281, 3
    %vm711 = vcmask 1045509
    %v712 = vsel %vm711, %v710, %v709
    %v713 = vrot.slane %v283, 2
    %vm714 = vcmask 1046534
    %v715 = vsel %vm714, %v713, %v712
    %v716 = vrot.slane %v285, 1
    %vm717 = vcmask 1047559
    %v718 = vsel %vm717, %v716, %v715
    %v719 = vrot.slane %v289, 7
    %v720 = vsel %vm699, %v719, %v287
    %v721 = vrot.slane %v291, 6
    %v722 = vsel %vm702, %v721, %v720
    %v723 = vrot.slane %v293, 5
    %v724 = vsel %vm705, %v723, %v722
    %v725 = vrot.slane %v295, 4
    %v726 = vsel %vm708, %v725, %v724
    %v727 = vrot.slane %v297, 3
    %v728 = vsel %vm711, %v727, %v726
    %v729 = vrot.slane %v299, 2
    %v730 = vsel %vm714, %v729, %v728
    %v731 = vrot.slane %v301, 1
    %v732 = vsel %vm717, %v731, %v730
    %v733 = vrot.slane %v305, 7
    %v734 = vsel %vm699, %v733, %v303
    %v735 = vrot.slane %v307, 6
    %v736 = vsel %vm702, %v735, %v734
    %v737 = vrot.slane %v309, 5
    %v738 = vsel %vm705, %v737, %v736
    %v739 = vrot.slane %v311, 4
    %v740 = vsel %vm708, %v739, %v738
    %v741 = vrot.slane %v313, 3
    %v742 = vsel %vm711, %v741, %v740
    %v743 = vrot.slane %v315, 2
    %v744 = vsel %vm714, %v743, %v742
    %v745 = vrot.slane %v317, 1
    %v746 = vsel %vm717, %v745, %v744
    %v747 = vrot.slane %v42, 4
    %v748 = vsel %vm44, %v718, 0
    %v750 = vsel %vm44, %v732, 0
    %v752 = vsel %vm44, %v746, 0
    %v754 = vsel %vm591, %v747, 0
    %756 = vmatprep.subr.mxu0 0.0
    %757 = vmatpush1.msra.mxu0 %v754
    %758 = vmatprep.subr.mxu0 0.0
    %759 = vmatpush1.msra.mxu0 0.0
    %760 = vmatprep.subr.mxu0 0.0
    %761 = vmatpush1.msra.mxu0 0.0
    %762 = vmatprep.subr.mxu0 0.0
    %763 = vmatpush1.msra.mxu0 0.0
    %764 = vmatprep.subr.mxu0 0.0
    %765 = vmatpush1.msra.mxu0 0.0
    %766 = vmatprep.subr.mxu0 0.0
    %767 = vmatpush1.msra.mxu0 0.0
    %768 = vmatprep.subr.mxu0 0.0
    %769 = vmatpush1.msra.mxu0 0.0
    %770 = vmatprep.subr.mxu0 0.0
    %771 = vmatpush1.msra.mxu0 0.0
    %772 = vmatprep.subr.mxu0 0.0
    %773 = vmatpush1.msra.mxu0 0.0
    %774 = vmatprep.subr.mxu0 0.0
    %775 = vmatpush1.msra.mxu0 0.0
    %776 = vmatprep.subr.mxu0 0.0
    %777 = vmatpush1.msra.mxu0 0.0
    %778 = vmatprep.subr.mxu0 0.0
    %779 = vmatpush1.msra.mxu0 0.0
    %780 = vmatprep.subr.mxu0 0.0
    %781 = vmatpush1.msra.mxu0 0.0
    %782 = vmatprep.subr.mxu0 0.0
    %783 = vmatpush1.msra.mxu0 0.0
    %784 = vmatprep.subr.mxu0 0.0
    %785 = vmatpush1.msra.mxu0 0.0
    %786 = vmatprep.subr.mxu0 0.0
    %787 = vmatpush1.msra.mxu0 0.0
    %788 = vmatprep.subr.mxu0 0.0
    %789 = vmatpush1.msra.mxu0 0.0
    %790 = vmatprep.subr.mxu0 0.0
    %791 = vmatpush1.msra.mxu0 0.0
    %792 = vmatprep.subr.mxu0 0.0
    %793 = vmatpush1.msra.mxu0 0.0
    %794 = vmatprep.subr.mxu0 0.0
    %795 = vmatpush1.msra.mxu0 0.0
    %796 = vmatprep.subr.mxu0 0.0
    %797 = vmatpush1.msra.mxu0 0.0
    %798 = vmatprep.subr.mxu0 0.0
    %799 = vmatpush1.msra.mxu0 0.0
    %800 = vmatprep.subr.mxu0 0.0
    %801 = vmatpush1.msra.mxu0 0.0
    %802 = vmatprep.subr.mxu0 0.0
    %803 = vmatpush1.msra.mxu0 0.0
    %804 = vmatprep.subr.mxu0 0.0
    %805 = vmatpush1.msra.mxu0 0.0
    %806 = vmatprep.subr.mxu0 0.0
    %807 = vmatpush1.msra.mxu0 0.0
    %808 = vmatprep.subr.mxu0 0.0
    %809 = vmatpush1.msra.mxu0 0.0
    %810 = vmatprep.subr.mxu0 0.0
    %811 = vmatpush1.msra.mxu0 0.0
    %812 = vmatprep.subr.mxu0 0.0
    %813 = vmatpush1.msra.mxu0 0.0
    %814 = vmatprep.subr.mxu0 0.0
    %815 = vmatpush1.msra.mxu0 0.0
    %816 = vmatprep.subr.mxu0 0.0
    %817 = vmatpush1.msra.mxu0 0.0
    %818 = vmatprep.subr.mxu0 0.0
    %819 = vmatpush1.msra.mxu0 0.0
    %820 = vmatprep.mubr.f32.mxu0 0.0
    %821 = vmatmul.mubr.f32.gmra.mrb[0].mxu0 %v748
    %v822 = vpop.f32.mrb[0].mxu0
    %v823 = vadd.f32 %v661, %v822
    %v824 = vpop.f32.mrb[0].mxu0
    %825 = vmatprep.mubr.f32.mxu0 0.0
    %826 = vmatmul.mubr.f32.gmra.mrb[0].mxu0 %v750
    %v827 = vpop.f32.mrb[0].mxu0
    %v828 = vadd.f32 %v666, %v827
    %v829 = vpop.f32.mrb[0].mxu0
    %830 = vmatprep.mubr.f32.mxu0 0.0
    %831 = vmatmul.mubr.f32.gmra.mrb[0].mxu0 %v752
    %v832 = vpop.f32.mrb[0].mxu0
    %v833 = vadd.f32 %v671, %v832
    %v834 = vpop.f32.mrb[0].mxu0
    %835 = vdwg.mxu0
    %v836 = vsub.f32 0.0, %v823
    %v837 = vsub.f32 0.0, %v828
    %v838 = vsub.f32 0.0, %v833
    %v842 = vcombine.high %v836, %v836
    %v844 = vunpack.c.l.s4 1966171168
    %v845 = vunpack.c.0.s8 %v844
    %v846 = vlaneseq
    %v847 = vshrl.u32 %v846, 7
    %v848 = vsub.s32 %v845, %v847
    %v849 = vrot.slane %v836, %v848
    %v851 = vunpack.c.l.s4 1966171168
    %v852 = vunpack.c.0.s8 %v851
    %v853 = vlaneseq
    %v854 = vshrl.u32 %v853, 7
    %v855 = vsub.s32 %v852, %v854
    %v856 = vrot.slane %v842, %v855
    %v857 = vcombine.high %v849, %v849
    %v858 = vcombine.high %v856, %v856
    %v860 = vunpack.c.l.s4 1966171168
    %v861 = vunpack.c.0.s8 %v860
    %v862 = vlaneseq
    %v863 = vshrl.u32 %v862, 7
    %v864 = vsub.s32 %v861, %v863
    %v865 = vrot.slane %v849, %v864
    %v867 = vunpack.c.l.s4 1966171168
    %v868 = vunpack.c.0.s8 %v867
    %v869 = vlaneseq
    %v870 = vshrl.u32 %v869, 7
    %v871 = vsub.s32 %v868, %v870
    %v872 = vrot.slane %v856, %v871
    %v874 = vunpack.c.l.s4 1966171168
    %v875 = vunpack.c.0.s8 %v874
    %v876 = vlaneseq
    %v877 = vshrl.u32 %v876, 7
    %v878 = vsub.s32 %v875, %v877
    %v879 = vrot.slane %v857, %v878
    %v881 = vunpack.c.l.s4 1966171168
    %v882 = vunpack.c.0.s8 %v881
    %v883 = vlaneseq
    %v884 = vshrl.u32 %v883, 7
    %v885 = vsub.s32 %v882, %v884
    %v886 = vrot.slane %v858, %v885
    %v887 = vcombine.high %v865, %v865
    %v888 = vcombine.high %v872, %v872
    %v889 = vcombine.high %v879, %v879
    %v890 = vcombine.high %v886, %v886
    %v891 = vcombine.high %v837, %v837
    %v893 = vunpack.c.l.s4 1966171168
    %v894 = vunpack.c.0.s8 %v893
    %v895 = vlaneseq
    %v896 = vshrl.u32 %v895, 7
    %v897 = vsub.s32 %v894, %v896
    %v898 = vrot.slane %v837, %v897
    %v900 = vunpack.c.l.s4 1966171168
    %v901 = vunpack.c.0.s8 %v900
    %v902 = vlaneseq
    %v903 = vshrl.u32 %v902, 7
    %v904 = vsub.s32 %v901, %v903
    %v905 = vrot.slane %v891, %v904
    %v906 = vcombine.high %v898, %v898
    %v907 = vcombine.high %v905, %v905
    %v909 = vunpack.c.l.s4 1966171168
    %v910 = vunpack.c.0.s8 %v909
    %v911 = vlaneseq
    %v912 = vshrl.u32 %v911, 7
    %v913 = vsub.s32 %v910, %v912
    %v914 = vrot.slane %v898, %v913
    %v916 = vunpack.c.l.s4 1966171168
    %v917 = vunpack.c.0.s8 %v916
    %v918 = vlaneseq
    %v919 = vshrl.u32 %v918, 7
    %v920 = vsub.s32 %v917, %v919
    %v921 = vrot.slane %v905, %v920
    %v923 = vunpack.c.l.s4 1966171168
    %v924 = vunpack.c.0.s8 %v923
    %v925 = vlaneseq
    %v926 = vshrl.u32 %v925, 7
    %v927 = vsub.s32 %v924, %v926
    %v928 = vrot.slane %v906, %v927
    %v930 = vunpack.c.l.s4 1966171168
    %v931 = vunpack.c.0.s8 %v930
    %v932 = vlaneseq
    %v933 = vshrl.u32 %v932, 7
    %v934 = vsub.s32 %v931, %v933
    %v935 = vrot.slane %v907, %v934
    %v936 = vcombine.high %v914, %v914
    %v937 = vcombine.high %v921, %v921
    %v938 = vcombine.high %v928, %v928
    %v939 = vcombine.high %v935, %v935
    %v940 = vcombine.high %v838, %v838
    %v942 = vunpack.c.l.s4 1966171168
    %v943 = vunpack.c.0.s8 %v942
    %v944 = vlaneseq
    %v945 = vshrl.u32 %v944, 7
    %v946 = vsub.s32 %v943, %v945
    %v947 = vrot.slane %v838, %v946
    %v949 = vunpack.c.l.s4 1966171168
    %v950 = vunpack.c.0.s8 %v949
    %v951 = vlaneseq
    %v952 = vshrl.u32 %v951, 7
    %v953 = vsub.s32 %v950, %v952
    %v954 = vrot.slane %v940, %v953
    %v955 = vcombine.high %v947, %v947
    %v956 = vcombine.high %v954, %v954
    %v958 = vunpack.c.l.s4 1966171168
    %v959 = vunpack.c.0.s8 %v958
    %v960 = vlaneseq
    %v961 = vshrl.u32 %v960, 7
    %v962 = vsub.s32 %v959, %v961
    %v963 = vrot.slane %v947, %v962
    %v965 = vunpack.c.l.s4 1966171168
    %v966 = vunpack.c.0.s8 %v965
    %v967 = vlaneseq
    %v968 = vshrl.u32 %v967, 7
    %v969 = vsub.s32 %v966, %v968
    %v970 = vrot.slane %v954, %v969
    %v972 = vunpack.c.l.s4 1966171168
    %v973 = vunpack.c.0.s8 %v972
    %v974 = vlaneseq
    %v975 = vshrl.u32 %v974, 7
    %v976 = vsub.s32 %v973, %v975
    %v977 = vrot.slane %v955, %v976
    %v979 = vunpack.c.l.s4 1966171168
    %v980 = vunpack.c.0.s8 %v979
    %v981 = vlaneseq
    %v982 = vshrl.u32 %v981, 7
    %v983 = vsub.s32 %v980, %v982
    %v984 = vrot.slane %v956, %v983
    %v985 = vcombine.high %v963, %v963
    %v986 = vcombine.high %v970, %v970
    %v987 = vcombine.high %v977, %v977
    %v988 = vcombine.high %v984, %v984
    %v989 = vlaneseq
    %v990 = vshrl.u32 %v989, 7
    %v991 = vsub.s32 0, %v990
    %v992 = vrot.slane %v865, %v991
    %v993 = vlaneseq
    %v994 = vshrl.u32 %v993, 7
    %v995 = vsub.s32 0, %v994
    %v996 = vrot.slane %v879, %v995
    %v997 = vlaneseq
    %v998 = vshrl.u32 %v997, 7
    %v999 = vsub.s32 0, %v998
    %v1000 = vrot.slane %v887, %v999
    %v1001 = vlaneseq
    %v1002 = vshrl.u32 %v1001, 7
    %v1003 = vsub.s32 0, %v1002
    %v1004 = vrot.slane %v889, %v1003
    %v1005 = vlaneseq
    %v1006 = vshrl.u32 %v1005, 7
    %v1007 = vsub.s32 0, %v1006
    %v1008 = vrot.slane %v872, %v1007
    %v1009 = vlaneseq
    %v1010 = vshrl.u32 %v1009, 7
    %v1011 = vsub.s32 0, %v1010
    %v1012 = vrot.slane %v886, %v1011
    %v1013 = vlaneseq
    %v1014 = vshrl.u32 %v1013, 7
    %v1015 = vsub.s32 0, %v1014
    %v1016 = vrot.slane %v888, %v1015
    %v1017 = vlaneseq
    %v1018 = vshrl.u32 %v1017, 7
    %v1019 = vsub.s32 0, %v1018
    %v1020 = vrot.slane %v890, %v1019
    %v1021 = vlaneseq
    %v1022 = vshrl.u32 %v1021, 7
    %v1023 = vsub.s32 0, %v1022
    %v1024 = vrot.slane %v914, %v1023
    %v1025 = vlaneseq
    %v1026 = vshrl.u32 %v1025, 7
    %v1027 = vsub.s32 0, %v1026
    %v1028 = vrot.slane %v928, %v1027
    %v1029 = vlaneseq
    %v1030 = vshrl.u32 %v1029, 7
    %v1031 = vsub.s32 0, %v1030
    %v1032 = vrot.slane %v936, %v1031
    %v1033 = vlaneseq
    %v1034 = vshrl.u32 %v1033, 7
    %v1035 = vsub.s32 0, %v1034
    %v1036 = vrot.slane %v938, %v1035
    %v1037 = vlaneseq
    %v1038 = vshrl.u32 %v1037, 7
    %v1039 = vsub.s32 0, %v1038
    %v1040 = vrot.slane %v921, %v1039
    %v1041 = vlaneseq
    %v1042 = vshrl.u32 %v1041, 7
    %v1043 = vsub.s32 0, %v1042
    %v1044 = vrot.slane %v935, %v1043
    %v1045 = vlaneseq
    %v1046 = vshrl.u32 %v1045, 7
    %v1047 = vsub.s32 0, %v1046
    %v1048 = vrot.slane %v937, %v1047
    %v1049 = vlaneseq
    %v1050 = vshrl.u32 %v1049, 7
    %v1051 = vsub.s32 0, %v1050
    %v1052 = vrot.slane %v939, %v1051
    %v1053 = vlaneseq
    %v1054 = vshrl.u32 %v1053, 7
    %v1055 = vsub.s32 0, %v1054
    %v1056 = vrot.slane %v963, %v1055
    %v1057 = vlaneseq
    %v1058 = vshrl.u32 %v1057, 7
    %v1059 = vsub.s32 0, %v1058
    %v1060 = vrot.slane %v977, %v1059
    %v1061 = vlaneseq
    %v1062 = vshrl.u32 %v1061, 7
    %v1063 = vsub.s32 0, %v1062
    %v1064 = vrot.slane %v985, %v1063
    %v1065 = vlaneseq
    %v1066 = vshrl.u32 %v1065, 7
    %v1067 = vsub.s32 0, %v1066
    %v1068 = vrot.slane %v987, %v1067
    %v1069 = vlaneseq
    %v1070 = vshrl.u32 %v1069, 7
    %v1071 = vsub.s32 0, %v1070
    %v1072 = vrot.slane %v970, %v1071
    %v1073 = vlaneseq
    %v1074 = vshrl.u32 %v1073, 7
    %v1075 = vsub.s32 0, %v1074
    %v1076 = vrot.slane %v984, %v1075
    %v1077 = vlaneseq
    %v1078 = vshrl.u32 %v1077, 7
    %v1079 = vsub.s32 0, %v1078
    %v1080 = vrot.slane %v986, %v1079
    %v1081 = vlaneseq
    %v1082 = vshrl.u32 %v1081, 7
    %v1083 = vsub.s32 0, %v1082
    %v1084 = vrot.slane %v988, %v1083
    %v1109 = vadd.f32 %v462, %v992
    %v1110 = vadd.f32 %v467, %v996
    %v1111 = vadd.f32 %v472, %v1000
    %v1112 = vadd.f32 %v477, %v1004
    %v1113 = vadd.f32 %v482, %v1008
    %v1114 = vadd.f32 %v487, %v1012
    %v1115 = vadd.f32 %v492, %v1016
    %v1116 = vadd.f32 %v497, %v1020
    %v1117 = vadd.f32 %v502, %v1024
    %v1118 = vadd.f32 %v507, %v1028
    %v1119 = vadd.f32 %v512, %v1032
    %v1120 = vadd.f32 %v517, %v1036
    %v1121 = vadd.f32 %v522, %v1040
    %v1122 = vadd.f32 %v527, %v1044
    %v1123 = vadd.f32 %v532, %v1048
    %v1124 = vadd.f32 %v537, %v1052
    %v1125 = vadd.f32 %v542, %v1056
    %v1126 = vadd.f32 %v547, %v1060
    %v1127 = vadd.f32 %v552, %v1064
    %v1128 = vadd.f32 %v557, %v1068
    %v1129 = vadd.f32 %v562, %v1072
    %v1130 = vadd.f32 %v567, %v1076
    %v1131 = vadd.f32 %v572, %v1080
    %v1132 = vadd.f32 %v577, %v1084
    %v1133 = vlaneseq
    %v1134 = vand.u32 %v1133, 127
    %v1135 = vcvt.f32.s32.to.zero.pseudo %v39
    %v1136 = vcvt.f32.s32.to.zero.pseudo %v40
    %v1137 = vcvt.f32.s32.to.zero.pseudo %v41
    %1138 = vset.pattern.permute.xlu0 3
    %1139 = vperm.xlu0 %1138, %v1135
    %v1140 = vpop.permute.xlu0 %1139
    %1141 = vset.pattern.permute.xlu0 3
    %1142 = vperm.xlu0 %1141, %v1136
    %v1143 = vpop.permute.xlu0 %1142
    %1144 = vset.pattern.permute.xlu0 3
    %1145 = vperm.xlu0 %1144, %v1137
    %v1146 = vpop.permute.xlu0 %1145
    %vm1147 = vcmp.lt.s32.totalorder %v1134, %v1140
    %vm1148 = vcmp.lt.s32.totalorder %v1134, %v1143
    %vm1149 = vcmp.lt.s32.totalorder %v1134, %v1146
    %v1150 = vsel %vm1147, 1, 0
    %v1151 = vsel %vm1148, 1, 0
    %v1152 = vsel %vm1149, 1, 0
    %v1153 = vcvt.s32.f32 %v1150
    %v1154 = vcvt.s32.f32 %v1151
    %v1155 = vcvt.s32.f32 %v1152
    %v1156 = vlaneseq
    %v1157 = vshrl.u32 %v1156, 7
    %v1158 = vsub.s32 0, %v1157
    %v1159 = vrot.slane %v1153, %v1158
    %1161 = vbcast.lane.b32.xlu0 %v1159, 256
    %v1162 = vpop.permute.xlu0 %1161
    %v1163 = vlaneseq
    %v1164 = vshrl.u32 %v1163, 7
    %v1165 = vsub.s32 1, %v1164
    %v1166 = vrot.slane %v1153, %v1165
    %1168 = vbcast.lane.b32.xlu0 %v1166, 256
    %v1169 = vpop.permute.xlu0 %1168
    %v1170 = vlaneseq
    %v1171 = vshrl.u32 %v1170, 7
    %v1172 = vsub.s32 2, %v1171
    %v1173 = vrot.slane %v1153, %v1172
    %1175 = vbcast.lane.b32.xlu0 %v1173, 256
    %v1176 = vpop.permute.xlu0 %1175
    %v1177 = vlaneseq
    %v1178 = vshrl.u32 %v1177, 7
    %v1179 = vsub.s32 3, %v1178
    %v1180 = vrot.slane %v1153, %v1179
    %1182 = vbcast.lane.b32.xlu0 %v1180, 256
    %v1183 = vpop.permute.xlu0 %1182
    %v1184 = vlaneseq
    %v1185 = vshrl.u32 %v1184, 7
    %v1186 = vsub.s32 4, %v1185
    %v1187 = vrot.slane %v1153, %v1186
    %1189 = vbcast.lane.b32.xlu0 %v1187, 256
    %v1190 = vpop.permute.xlu0 %1189
    %v1191 = vlaneseq
    %v1192 = vshrl.u32 %v1191, 7
    %v1193 = vsub.s32 5, %v1192
    %v1194 = vrot.slane %v1153, %v1193
    %1196 = vbcast.lane.b32.xlu0 %v1194, 256
    %v1197 = vpop.permute.xlu0 %1196
    %v1198 = vlaneseq
    %v1199 = vshrl.u32 %v1198, 7
    %v1200 = vsub.s32 6, %v1199
    %v1201 = vrot.slane %v1153, %v1200
    %1203 = vbcast.lane.b32.xlu0 %v1201, 256
    %v1204 = vpop.permute.xlu0 %1203
    %v1205 = vlaneseq
    %v1206 = vshrl.u32 %v1205, 7
    %v1207 = vsub.s32 7, %v1206
    %v1208 = vrot.slane %v1153, %v1207
    %1210 = vbcast.lane.b32.xlu0 %v1208, 256
    %v1211 = vpop.permute.xlu0 %1210
    %v1212 = vlaneseq
    %v1213 = vshrl.u32 %v1212, 7
    %v1214 = vsub.s32 0, %v1213
    %v1215 = vrot.slane %v1154, %v1214
    %1217 = vbcast.lane.b32.xlu0 %v1215, 256
    %v1218 = vpop.permute.xlu0 %1217
    %v1219 = vlaneseq
    %v1220 = vshrl.u32 %v1219, 7
    %v1221 = vsub.s32 1, %v1220
    %v1222 = vrot.slane %v1154, %v1221
    %1224 = vbcast.lane.b32.xlu0 %v1222, 256
    %v1225 = vpop.permute.xlu0 %1224
    %v1226 = vlaneseq
    %v1227 = vshrl.u32 %v1226, 7
    %v1228 = vsub.s32 2, %v1227
    %v1229 = vrot.slane %v1154, %v1228
    %1231 = vbcast.lane.b32.xlu0 %v1229, 256
    %v1232 = vpop.permute.xlu0 %1231
    %v1233 = vlaneseq
    %v1234 = vshrl.u32 %v1233, 7
    %v1235 = vsub.s32 3, %v1234
    %v1236 = vrot.slane %v1154, %v1235
    %1238 = vbcast.lane.b32.xlu0 %v1236, 256
    %v1239 = vpop.permute.xlu0 %1238
    %v1240 = vlaneseq
    %v1241 = vshrl.u32 %v1240, 7
    %v1242 = vsub.s32 4, %v1241
    %v1243 = vrot.slane %v1154, %v1242
    %1245 = vbcast.lane.b32.xlu0 %v1243, 256
    %v1246 = vpop.permute.xlu0 %1245
    %v1247 = vlaneseq
    %v1248 = vshrl.u32 %v1247, 7
    %v1249 = vsub.s32 5, %v1248
    %v1250 = vrot.slane %v1154, %v1249
    %1252 = vbcast.lane.b32.xlu0 %v1250, 256
    %v1253 = vpop.permute.xlu0 %1252
    %v1254 = vlaneseq
    %v1255 = vshrl.u32 %v1254, 7
    %v1256 = vsub.s32 6, %v1255
    %v1257 = vrot.slane %v1154, %v1256
    %1259 = vbcast.lane.b32.xlu0 %v1257, 256
    %v1260 = vpop.permute.xlu0 %1259
    %v1261 = vlaneseq
    %v1262 = vshrl.u32 %v1261, 7
    %v1263 = vsub.s32 7, %v1262
    %v1264 = vrot.slane %v1154, %v1263
    %1266 = vbcast.lane.b32.xlu0 %v1264, 256
    %v1267 = vpop.permute.xlu0 %1266
    %v1268 = vlaneseq
    %v1269 = vshrl.u32 %v1268, 7
    %v1270 = vsub.s32 0, %v1269
    %v1271 = vrot.slane %v1155, %v1270
    %1273 = vbcast.lane.b32.xlu0 %v1271, 256
    %v1274 = vpop.permute.xlu0 %1273
    %v1275 = vlaneseq
    %v1276 = vshrl.u32 %v1275, 7
    %v1277 = vsub.s32 1, %v1276
    %v1278 = vrot.slane %v1155, %v1277
    %1280 = vbcast.lane.b32.xlu0 %v1278, 256
    %v1281 = vpop.permute.xlu0 %1280
    %v1282 = vlaneseq
    %v1283 = vshrl.u32 %v1282, 7
    %v1284 = vsub.s32 2, %v1283
    %v1285 = vrot.slane %v1155, %v1284
    %1287 = vbcast.lane.b32.xlu0 %v1285, 256
    %v1288 = vpop.permute.xlu0 %1287
    %v1289 = vlaneseq
    %v1290 = vshrl.u32 %v1289, 7
    %v1291 = vsub.s32 3, %v1290
    %v1292 = vrot.slane %v1155, %v1291
    %1294 = vbcast.lane.b32.xlu0 %v1292, 256
    %v1295 = vpop.permute.xlu0 %1294
    %v1296 = vlaneseq
    %v1297 = vshrl.u32 %v1296, 7
    %v1298 = vsub.s32 4, %v1297
    %v1299 = vrot.slane %v1155, %v1298
    %1301 = vbcast.lane.b32.xlu0 %v1299, 256
    %v1302 = vpop.permute.xlu0 %1301
    %v1303 = vlaneseq
    %v1304 = vshrl.u32 %v1303, 7
    %v1305 = vsub.s32 5, %v1304
    %v1306 = vrot.slane %v1155, %v1305
    %1308 = vbcast.lane.b32.xlu0 %v1306, 256
    %v1309 = vpop.permute.xlu0 %1308
    %v1310 = vlaneseq
    %v1311 = vshrl.u32 %v1310, 7
    %v1312 = vsub.s32 6, %v1311
    %v1313 = vrot.slane %v1155, %v1312
    %1315 = vbcast.lane.b32.xlu0 %v1313, 256
    %v1316 = vpop.permute.xlu0 %1315
    %v1317 = vlaneseq
    %v1318 = vshrl.u32 %v1317, 7
    %v1319 = vsub.s32 7, %v1318
    %v1320 = vrot.slane %v1155, %v1319
    %1322 = vbcast.lane.b32.xlu0 %v1320, 256
    %v1323 = vpop.permute.xlu0 %1322
    %v1324 = vmul.f32 %v1109, %v1162
    %v1325 = vmul.f32 %v1110, %v1169
    %v1326 = vmul.f32 %v1111, %v1176
    %v1327 = vmul.f32 %v1112, %v1183
    %v1328 = vmul.f32 %v1113, %v1190
    %v1329 = vmul.f32 %v1114, %v1197
    %v1330 = vmul.f32 %v1115, %v1204
    %v1331 = vmul.f32 %v1116, %v1211
    %v1332 = vmul.f32 %v1117, %v1218
    %v1333 = vmul.f32 %v1118, %v1225
    %v1334 = vmul.f32 %v1119, %v1232
    %v1335 = vmul.f32 %v1120, %v1239
    %v1336 = vmul.f32 %v1121, %v1246
    %v1337 = vmul.f32 %v1122, %v1253
    %v1338 = vmul.f32 %v1123, %v1260
    %v1339 = vmul.f32 %v1124, %v1267
    %v1340 = vmul.f32 %v1125, %v1274
    %v1341 = vmul.f32 %v1126, %v1281
    %v1342 = vmul.f32 %v1127, %v1288
    %v1343 = vmul.f32 %v1128, %v1295
    %v1344 = vmul.f32 %v1129, %v1302
    %v1345 = vmul.f32 %v1130, %v1309
    %v1346 = vmul.f32 %v1131, %v1316
    %v1347 = vmul.f32 %v1132, %v1323
    %v1348 = vlaneseq
    %v1349 = vshrl.u32 %v1348, 7
    %v1350 = vsub.s32 2, %v1349
    %v1351 = vrot.slane %v43, %v1350
    %v1352 = vadd.f32 %v1324, %v1351
    %v1353 = vadd.f32 %v1325, %v1351
    %v1354 = vadd.f32 %v1326, %v1351
    %v1355 = vadd.f32 %v1327, %v1351
    %v1356 = vadd.f32 %v1328, %v1351
    %v1357 = vadd.f32 %v1329, %v1351
    %v1358 = vadd.f32 %v1330, %v1351
    %v1359 = vadd.f32 %v1331, %v1351
    %v1360 = vadd.f32 %v1332, %v1351
    %v1361 = vadd.f32 %v1333, %v1351
    %v1362 = vadd.f32 %v1334, %v1351
    %v1363 = vadd.f32 %v1335, %v1351
    %v1364 = vadd.f32 %v1336, %v1351
    %v1365 = vadd.f32 %v1337, %v1351
    %v1366 = vadd.f32 %v1338, %v1351
    %v1367 = vadd.f32 %v1339, %v1351
    %v1368 = vadd.f32 %v1340, %v1351
    %v1369 = vadd.f32 %v1341, %v1351
    %v1370 = vadd.f32 %v1342, %v1351
    %v1371 = vadd.f32 %v1343, %v1351
    %v1372 = vadd.f32 %v1344, %v1351
    %v1373 = vadd.f32 %v1345, %v1351
    %v1374 = vadd.f32 %v1346, %v1351
    %v1375 = vadd.f32 %v1347, %v1351
    %v1376 = vmax.f32 %v1352, 0.0
    %v1377 = vmax.f32 %v1353, 0.0
    %v1378 = vmax.f32 %v1354, 0.0
    %v1379 = vmax.f32 %v1355, 0.0
    %v1380 = vmax.f32 %v1356, 0.0
    %v1381 = vmax.f32 %v1357, 0.0
    %v1382 = vmax.f32 %v1358, 0.0
    %v1383 = vmax.f32 %v1359, 0.0
    %v1384 = vmax.f32 %v1360, 0.0
    %v1385 = vmax.f32 %v1361, 0.0
    %v1386 = vmax.f32 %v1362, 0.0
    %v1387 = vmax.f32 %v1363, 0.0
    %v1388 = vmax.f32 %v1364, 0.0
    %v1389 = vmax.f32 %v1365, 0.0
    %v1390 = vmax.f32 %v1366, 0.0
    %v1391 = vmax.f32 %v1367, 0.0
    %v1392 = vmax.f32 %v1368, 0.0
    %v1393 = vmax.f32 %v1369, 0.0
    %v1394 = vmax.f32 %v1370, 0.0
    %v1395 = vmax.f32 %v1371, 0.0
    %v1396 = vmax.f32 %v1372, 0.0
    %v1397 = vmax.f32 %v1373, 0.0
    %v1398 = vmax.f32 %v1374, 0.0
    %v1399 = vmax.f32 %v1375, 0.0
    %vm1400 = vcmask 523264
    %v1401 = vsel %vm1400, %v1376, -inf
    %v1402 = vrot.slane %v1401, 4
    %v1403 = vmax.f32 %v1401, %v1402
    %v1404 = vrot.slane %v1403, 2
    %v1405 = vmax.f32 %v1403, %v1404
    %v1406 = vrot.slane %v1405, 1
    %v1407 = vmax.f32 %v1405, %v1406
    %v1408 = vsel %vm1400, %v1377, -inf
    %v1409 = vrot.slane %v1408, 4
    %v1410 = vmax.f32 %v1408, %v1409
    %v1411 = vrot.slane %v1410, 2
    %v1412 = vmax.f32 %v1410, %v1411
    %v1413 = vrot.slane %v1412, 1
    %v1414 = vmax.f32 %v1412, %v1413
    %v1415 = vsel %vm1400, %v1378, -inf
    %v1416 = vrot.slane %v1415, 4
    %v1417 = vmax.f32 %v1415, %v1416
    %v1418 = vrot.slane %v1417, 2
    %v1419 = vmax.f32 %v1417, %v1418
    %v1420 = vrot.slane %v1419, 1
    %v1421 = vmax.f32 %v1419, %v1420
    %v1422 = vsel %vm1400, %v1379, -inf
    %v1423 = vrot.slane %v1422, 4
    %v1424 = vmax.f32 %v1422, %v1423
    %v1425 = vrot.slane %v1424, 2
    %v1426 = vmax.f32 %v1424, %v1425
    %v1427 = vrot.slane %v1426, 1
    %v1428 = vmax.f32 %v1426, %v1427
    %v1429 = vsel %vm1400, %v1380, -inf
    %v1430 = vrot.slane %v1429, 4
    %v1431 = vmax.f32 %v1429, %v1430
    %v1432 = vrot.slane %v1431, 2
    %v1433 = vmax.f32 %v1431, %v1432
    %v1434 = vrot.slane %v1433, 1
    %v1435 = vmax.f32 %v1433, %v1434
    %v1436 = vsel %vm1400, %v1381, -inf
    %v1437 = vrot.slane %v1436, 4
    %v1438 = vmax.f32 %v1436, %v1437
    %v1439 = vrot.slane %v1438, 2
    %v1440 = vmax.f32 %v1438, %v1439
    %v1441 = vrot.slane %v1440, 1
    %v1442 = vmax.f32 %v1440, %v1441
    %v1443 = vsel %vm1400, %v1382, -inf
    %v1444 = vrot.slane %v1443, 4
    %v1445 = vmax.f32 %v1443, %v1444
    %v1446 = vrot.slane %v1445, 2
    %v1447 = vmax.f32 %v1445, %v1446
    %v1448 = vrot.slane %v1447, 1
    %v1449 = vmax.f32 %v1447, %v1448
    %v1450 = vsel %vm1400, %v1383, -inf
    %v1451 = vrot.slane %v1450, 4
    %v1452 = vmax.f32 %v1450, %v1451
    %v1453 = vrot.slane %v1452, 2
    %v1454 = vmax.f32 %v1452, %v1453
    %v1455 = vrot.slane %v1454, 1
    %v1456 = vmax.f32 %v1454, %v1455
    %v1457 = vsel %vm1400, %v1384, -inf
    %v1458 = vrot.slane %v1457, 4
    %v1459 = vmax.f32 %v1457, %v1458
    %v1460 = vrot.slane %v1459, 2
    %v1461 = vmax.f32 %v1459, %v1460
    %v1462 = vrot.slane %v1461, 1
    %v1463 = vmax.f32 %v1461, %v1462
    %v1464 = vsel %vm1400, %v1385, -inf
    %v1465 = vrot.slane %v1464, 4
    %v1466 = vmax.f32 %v1464, %v1465
    %v1467 = vrot.slane %v1466, 2
    %v1468 = vmax.f32 %v1466, %v1467
    %v1469 = vrot.slane %v1468, 1
    %v1470 = vmax.f32 %v1468, %v1469
    %v1471 = vsel %vm1400, %v1386, -inf
    %v1472 = vrot.slane %v1471, 4
    %v1473 = vmax.f32 %v1471, %v1472
    %v1474 = vrot.slane %v1473, 2
    %v1475 = vmax.f32 %v1473, %v1474
    %v1476 = vrot.slane %v1475, 1
    %v1477 = vmax.f32 %v1475, %v1476
    %v1478 = vsel %vm1400, %v1387, -inf
    %v1479 = vrot.slane %v1478, 4
    %v1480 = vmax.f32 %v1478, %v1479
    %v1481 = vrot.slane %v1480, 2
    %v1482 = vmax.f32 %v1480, %v1481
    %v1483 = vrot.slane %v1482, 1
    %v1484 = vmax.f32 %v1482, %v1483
    %v1485 = vsel %vm1400, %v1388, -inf
    %v1486 = vrot.slane %v1485, 4
    %v1487 = vmax.f32 %v1485, %v1486
    %v1488 = vrot.slane %v1487, 2
    %v1489 = vmax.f32 %v1487, %v1488
    %v1490 = vrot.slane %v1489, 1
    %v1491 = vmax.f32 %v1489, %v1490
    %v1492 = vsel %vm1400, %v1389, -inf
    %v1493 = vrot.slane %v1492, 4
    %v1494 = vmax.f32 %v1492, %v1493
    %v1495 = vrot.slane %v1494, 2
    %v1496 = vmax.f32 %v1494, %v1495
    %v1497 = vrot.slane %v1496, 1
    %v1498 = vmax.f32 %v1496, %v1497
    %v1499 = vsel %vm1400, %v1390, -inf
    %v1500 = vrot.slane %v1499, 4
    %v1501 = vmax.f32 %v1499, %v1500
    %v1502 = vrot.slane %v1501, 2
    %v1503 = vmax.f32 %v1501, %v1502
    %v1504 = vrot.slane %v1503, 1
    %v1505 = vmax.f32 %v1503, %v1504
    %v1506 = vsel %vm1400, %v1391, -inf
    %v1507 = vrot.slane %v1506, 4
    %v1508 = vmax.f32 %v1506, %v1507
    %v1509 = vrot.slane %v1508, 2
    %v1510 = vmax.f32 %v1508, %v1509
    %v1511 = vrot.slane %v1510, 1
    %v1512 = vmax.f32 %v1510, %v1511
    %v1513 = vsel %vm1400, %v1392, -inf
    %v1514 = vrot.slane %v1513, 4
    %v1515 = vmax.f32 %v1513, %v1514
    %v1516 = vrot.slane %v1515, 2
    %v1517 = vmax.f32 %v1515, %v1516
    %v1518 = vrot.slane %v1517, 1
    %v1519 = vmax.f32 %v1517, %v1518
    %v1520 = vsel %vm1400, %v1393, -inf
    %v1521 = vrot.slane %v1520, 4
    %v1522 = vmax.f32 %v1520, %v1521
    %v1523 = vrot.slane %v1522, 2
    %v1524 = vmax.f32 %v1522, %v1523
    %v1525 = vrot.slane %v1524, 1
    %v1526 = vmax.f32 %v1524, %v1525
    %v1527 = vsel %vm1400, %v1394, -inf
    %v1528 = vrot.slane %v1527, 4
    %v1529 = vmax.f32 %v1527, %v1528
    %v1530 = vrot.slane %v1529, 2
    %v1531 = vmax.f32 %v1529, %v1530
    %v1532 = vrot.slane %v1531, 1
    %v1533 = vmax.f32 %v1531, %v1532
    %v1534 = vsel %vm1400, %v1395, -inf
    %v1535 = vrot.slane %v1534, 4
    %v1536 = vmax.f32 %v1534, %v1535
    %v1537 = vrot.slane %v1536, 2
    %v1538 = vmax.f32 %v1536, %v1537
    %v1539 = vrot.slane %v1538, 1
    %v1540 = vmax.f32 %v1538, %v1539
    %v1541 = vsel %vm1400, %v1396, -inf
    %v1542 = vrot.slane %v1541, 4
    %v1543 = vmax.f32 %v1541, %v1542
    %v1544 = vrot.slane %v1543, 2
    %v1545 = vmax.f32 %v1543, %v1544
    %v1546 = vrot.slane %v1545, 1
    %v1547 = vmax.f32 %v1545, %v1546
    %v1548 = vsel %vm1400, %v1397, -inf
    %v1549 = vrot.slane %v1548, 4
    %v1550 = vmax.f32 %v1548, %v1549
    %v1551 = vrot.slane %v1550, 2
    %v1552 = vmax.f32 %v1550, %v1551
    %v1553 = vrot.slane %v1552, 1
    %v1554 = vmax.f32 %v1552, %v1553
    %v1555 = vsel %vm1400, %v1398, -inf
    %v1556 = vrot.slane %v1555, 4
    %v1557 = vmax.f32 %v1555, %v1556
    %v1558 = vrot.slane %v1557, 2
    %v1559 = vmax.f32 %v1557, %v1558
    %v1560 = vrot.slane %v1559, 1
    %v1561 = vmax.f32 %v1559, %v1560
    %v1562 = vsel %vm1400, %v1399, -inf
    %v1563 = vrot.slane %v1562, 4
    %v1564 = vmax.f32 %v1562, %v1563
    %v1565 = vrot.slane %v1564, 2
    %v1566 = vmax.f32 %v1564, %v1565
    %v1567 = vrot.slane %v1566, 1
    %v1568 = vmax.f32 %v1566, %v1567
    %v1593 = vsel %vm699, %v1414, %v1407
    %v1594 = vsel %vm702, %v1421, %v1593
    %v1595 = vsel %vm705, %v1428, %v1594
    %v1596 = vsel %vm708, %v1435, %v1595
    %v1597 = vsel %vm711, %v1442, %v1596
    %v1598 = vsel %vm714, %v1449, %v1597
    %v1599 = vsel %vm717, %v1456, %v1598
    %v1600 = vsel %vm699, %v1470, %v1463
    %v1601 = vsel %vm702, %v1477, %v1600
    %v1602 = vsel %vm705, %v1484, %v1601
    %v1603 = vsel %vm708, %v1491, %v1602
    %v1604 = vsel %vm711, %v1498, %v1603
    %v1605 = vsel %vm714, %v1505, %v1604
    %v1606 = vsel %vm717, %v1512, %v1605
    %v1607 = vsel %vm699, %v1526, %v1519
    %v1608 = vsel %vm702, %v1533, %v1607
    %v1609 = vsel %vm705, %v1540, %v1608
    %v1610 = vsel %vm708, %v1547, %v1609
    %v1611 = vsel %vm711, %v1554, %v1610
    %v1612 = vsel %vm714, %v1561, %v1611
    %v1613 = vsel %vm717, %v1568, %v1612
    %1617 = vst.msk [vmem:[#allocation2] sm:$0xff] %vm1400, %v1599
    %1618 = vst.msk [vmem:[#allocation2 + $0x8] sm:$0xff] %vm1400, %v1606
    %1619 = vst.msk [vmem:[#allocation2 + $0x10] sm:$0xff] %vm1400, %v1613
    // Predicated region
    $region14: #{tpu_custom_call.1} parent=1 // pred_check
      _
    $region15: #{tpu_custom_call.1} parent=1 // pred_check_branch
      %1621 = sbr.rel (0) target = $region17
    $region16: #{tpu_custom_call.1} parent=1 // pred_region
      %s1623 = ssub.s32 384, 384
      %1624 = vsyncadd [#allocation3], %s1623
      %s1625 = sshll.u32 [#allocation2], 4
      %s1626 = int_to_ptr.vmem [resolvable:$true] %s1625
      %1631 = dma.vmem_to_hbm [thread:$0]  %s1626, 384, %s3, [#allocation3], 128, 128, 8
    $region17: #{tpu_custom_call.1} parent=1 // pred_fallthru
      _
    // Predicated region
    $region18: #{tpu_custom_call.1} parent=1 // pred_check
      _
    $region19: #{tpu_custom_call.1} parent=1 // pred_check_branch
      %1633 = sbr.rel (0) target = $region21
    $region20: #{tpu_custom_call.1} parent=1 // pred_region
      %1634 = dma.done [#allocation3], 384
    $region21: #{tpu_custom_call.1} parent=1 // pred_fallthru
      _
    %1635 = vsyncpa [#allocation3], 1

</llo_original>
